<compile_context>
chip_gen: v7x
topology: tpu7x:2x2x1
jax: 0.10.0
libtpu: 0.0.40
codegen_flags: <defaults>
</compile_context>

<pallas_src>
import jax
import jax.numpy as jnp
from jax.experimental import pallas as pl
from jax.experimental.pallas import tpu as pltpu

EPSILON = 1e-4  # PPNet.epsilon


def ppnet_kernel(x_ref,                       # (TILE_N, L, 128) bf16 features
                 w1_ref, b1_ref,              # (128, 64) bf16, (1, 64) f32
                 w2_ref, b2_ref,              # (64, 64)  bf16, (1, 64) f32
                 w3_ref, b3_ref,              # (64, 32)  bf16, (1, 32) f32
                 w4_ref, b4_ref,              # (32, 32)  bf16, (1, 32) f32
                 protoTn2_ref,                # (32, P_pad) bf16  == -2 * proto.T (zero-padded)
                 p2_ref,                      # (1, P_pad) f32    == sum(proto^2) (zero-padded)
                 mind_ref):                   # (TILE_N, P_pad) f32 output
    f32 = jnp.float32
    bf16 = jnp.bfloat16
    tn, L, C = x_ref.shape

    # flatten batch/spatial rows; channel axis stays lane-dense (C = 128)
    x = x_ref[...].reshape(tn * L, C)

    # ---- add_on_layers (bottleneck): 128->64 ReLU, 64->64 ReLU,
    #                                  64->32 ReLU, 32->32 Sigmoid ----
    h = jnp.dot(x, w1_ref[...], preferred_element_type=f32) + b1_ref[...]
    h = jnp.maximum(h, 0.0)
    h = jnp.dot(h.astype(bf16), w2_ref[...], preferred_element_type=f32) + b2_ref[...]
    h = jnp.maximum(h, 0.0)
    h = jnp.dot(h.astype(bf16), w3_ref[...], preferred_element_type=f32) + b3_ref[...]
    h = jnp.maximum(h, 0.0)
    h = jnp.dot(h.astype(bf16), w4_ref[...], preferred_element_type=f32) + b4_ref[...]
    h = jax.nn.sigmoid(h)                                   # (tn*L, D) f32

    # ---- _l2_convolution (kernel_size=1): ||h||^2 - 2 h.p + ||p||^2 ----
    # (-2 is pre-folded into protoTn2; ||p||^2 precomputed into p2)
    x2 = jnp.sum(h * h, axis=-1, keepdims=True)             # (tn*L, 1)
    xp = jnp.dot(h.astype(bf16), protoTn2_ref[...],
                 preferred_element_type=f32)                 # (tn*L, P_pad)
    dist = jnp.maximum(x2 + xp + p2_ref[...], 0.0)           # (tn*L, P_pad)

    # ---- global min-pool over the spatial axis (vectorized, single store) ----
    mind_ref[...] = jnp.min(dist.reshape(tn, L, -1), axis=1)


def _pick_tile_n(N, L):
    # Keep TILE_N * L rows of intermediates (plus double-buffered bf16 input)
    # comfortably inside a 32 MiB scoped-VMEM budget, which is safe even on
    # v7x (64 MiB physical per TensorCore).
    max_rows = 4096
    cap = max(8, (max_rows // max(L, 1)) // 8 * 8)
    return N if N <= cap else cap


@jax.jit
def ppnet_forward(x_ncl, params):
    """x_ncl: (N, 128, L) backbone feature map in PyTorch NCL layout."""
    N, C, L = x_ncl.shape
    protoT = params["protoT"]                 # (D, P) f32
    p2 = params["p2"]                         # (1, P) f32
    wlastT = params["wlastT"]                 # (P, num_classes) f32
    D, P = protoT.shape
    P_pad = ((P + 127) // 128) * 128

    # lane-dense padding of the prototype axis; -2 folded into the matrix
    protoT_neg2 = jnp.zeros((D, P_pad), jnp.float32).at[:, :P].set(-2.0 * protoT)
    p2_pad = jnp.zeros((1, P_pad), jnp.float32).at[:, :P].set(p2)

    # channels-last + bf16 activations for the MXU.
    # TODO(synk): ideally the (undefined) backbone emits channels-last bf16
    # directly so this transpose never costs an extra HBM round trip.
    x = jnp.transpose(x_ncl, (0, 2, 1)).astype(jnp.bfloat16)   # (N, L, C)

    bf = jnp.bfloat16
    args = (x,
            params["w1"].astype(bf), params["b1"],
            params["w2"].astype(bf), params["b2"],
            params["w3"].astype(bf), params["b3"],
            params["w4"].astype(bf), params["b4"],
            protoT_neg2.astype(bf), p2_pad)

    TILE_N = _pick_tile_n(N, L)
    grid = (pl.cdiv(N, TILE_N),)

    in_specs = [pl.BlockSpec((TILE_N, L, C), lambda i: (i, 0, 0))]
    for a in args[1:]:  # weights / prototypes: resident, constant index_map
        in_specs.append(pl.BlockSpec(a.shape, lambda i: (0, 0)))
    out_spec = pl.BlockSpec((TILE_N, P_pad), lambda i: (i, 0))

    flops = 2 * N * L * (C * 64 + 64 * 64 + 64 * D + D * D + D * P_pad)
    weight_bytes = sum(int(a.size) * a.dtype.itemsize for a in args[1:])
    cost = pl.CostEstimate(
        flops=flops,
        transcendentals=N * L * D,
        bytes_accessed=N * L * C * 2 + N * P_pad * 4 + weight_bytes)

    min_d_pad = pl.pallas_call(
        ppnet_kernel,
        out_shape=jax.ShapeDtypeStruct((N, P_pad), jnp.float32),
        grid=grid,
        in_specs=in_specs,
        out_specs=out_spec,
        compiler_params=pltpu.CompilerParams(
            dimension_semantics=("parallel",),
            vmem_limit_bytes=32 * 1024 * 1024),
        cost_estimate=cost,
    )(*args)

    # tiny tail on already-reduced (N, P) tensors -> wrapper (per perf review)
    min_d = min_d_pad[:, :P]
    act = jnp.log((min_d + 1.0) / (min_d + EPSILON))      # distance_2_similarity('log')
    logits = act @ wlastT                                 # last_layer (no bias)
    return logits, min_d


def init_params(key, in_channels, prototype_shape, num_classes):
    """Deterministic parameter construction mirroring PPNet.__init__."""
    P, D, k = prototype_shape
    assert k == 1, "kernel implemented for prototype kernel_size 1"
    assert P % num_classes == 0

    # bottleneck add_on layer channel plan (same loop as the PyTorch code)
    layer_dims = []
    cur = in_channels
    while cur > D or len(layer_dims) == 0:
        out = max(D, cur // 2)
        layer_dims.append((cur, out))
        layer_dims.append((out, out))
        cur = cur // 2
    assert len(layer_dims) == 4, "kernel hard-codes the 128->32 bottleneck (4 convs)"

    keys = jax.random.split(key, len(layer_dims) + 1)
    params = {}
    for i, (cin, cout) in enumerate(layer_dims):
        # kaiming_normal_(mode='fan_out', relu): std = sqrt(2 / (cout * k))
        std = (2.0 / cout) ** 0.5
        w = std * jax.random.normal(keys[i], (cin, cout), jnp.float32)
        params[f"w{i + 1}"] = w                       # stored as (Cin, Cout) = W[:, :, 0].T
        params[f"b{i + 1}"] = jnp.zeros((1, cout), jnp.float32)   # bias init = 0

    # prototype_vectors ~ torch.rand(prototype_shape)
    proto = jax.random.uniform(keys[-1], prototype_shape, dtype=jnp.float32)
    params["protoT"] = proto[:, :, 0].T                            # (D, P)
    params["p2"] = jnp.sum(proto ** 2, axis=(1, 2)).reshape(1, P)  # (1, P)

    # last layer: set_last_layer_incorrect_connection(incorrect_strength=-0.5)
    proto_per_class = P // num_classes
    class_id = jnp.arange(P) // proto_per_class
    identity = jax.nn.one_hot(class_id, num_classes, dtype=jnp.float32)  # (P, C)
    params["wlastT"] = 1.0 * identity + (-0.5) * (1.0 - identity)        # = W.T

    return params


if __name__ == "__main__":
    key = jax.random.PRNGKey(0)
    k_x, k_p = jax.random.split(key)

    N, C, L = 2, 128, 16                    # backbone feature map (N, 128, L)
    prototype_shape = (8, 32, 1)            # (num_prototypes, D, kernel)
    num_classes = 4

    x = jax.random.normal(k_x, (N, C, L), dtype=jnp.float32)
    params = init_params(k_p, C, prototype_shape, num_classes)

    logits, min_distances = ppnet_forward(x, params)
    jax.block_until_ready((logits, min_distances))

    assert logits.shape == (N, num_classes)
    assert min_distances.shape == (N, prototype_shape[0])
    assert bool(jnp.all(jnp.isfinite(logits)))
    assert bool(jnp.all(min_distances >= 0.0))

    print("KERNEL_OK")
</pallas_src>

<mosaic_0001>
module attributes {stable_mosaic.version = 11 : i64} {
  func.func @ppnet_kernel(%arg0: i32, %arg1: memref<2x16x128xbf16, #tpu.memory_space<vmem>>, %arg2: memref<128x64xbf16, #tpu.memory_space<vmem>>, %arg3: memref<1x64xf32, #tpu.memory_space<vmem>>, %arg4: memref<64x64xbf16, #tpu.memory_space<vmem>>, %arg5: memref<1x64xf32, #tpu.memory_space<vmem>>, %arg6: memref<64x32xbf16, #tpu.memory_space<vmem>>, %arg7: memref<1x32xf32, #tpu.memory_space<vmem>>, %arg8: memref<32x32xbf16, #tpu.memory_space<vmem>>, %arg9: memref<1x32xf32, #tpu.memory_space<vmem>>, %arg10: memref<32x128xbf16, #tpu.memory_space<vmem>>, %arg11: memref<1x128xf32, #tpu.memory_space<vmem>>, %arg12: memref<2x128xf32, #tpu.memory_space<vmem>>) attributes {dimension_semantics = [#tpu.dimension_semantics<parallel>], iteration_bounds = array<i64: 1>, scalar_prefetch = 0 : i64, scratch_operands = 0 : i64, tpu.core_type = #tpu.core_type<tc>, window_params = [{transform_indices = @transform_0, window_bounds = array<i64: 2, 16, 128>}, {pipeline_mode = #tpu.pipeline_mode<synchronous>, transform_indices = @transform_1, window_bounds = array<i64: 128, 64>}, {pipeline_mode = #tpu.pipeline_mode<synchronous>, transform_indices = @transform_2, window_bounds = array<i64: 1, 64>}, {pipeline_mode = #tpu.pipeline_mode<synchronous>, transform_indices = @transform_3, window_bounds = array<i64: 64, 64>}, {pipeline_mode = #tpu.pipeline_mode<synchronous>, transform_indices = @transform_4, window_bounds = array<i64: 1, 64>}, {pipeline_mode = #tpu.pipeline_mode<synchronous>, transform_indices = @transform_5, window_bounds = array<i64: 64, 32>}, {pipeline_mode = #tpu.pipeline_mode<synchronous>, transform_indices = @transform_6, window_bounds = array<i64: 1, 32>}, {pipeline_mode = #tpu.pipeline_mode<synchronous>, transform_indices = @transform_7, window_bounds = array<i64: 32, 32>}, {pipeline_mode = #tpu.pipeline_mode<synchronous>, transform_indices = @transform_8, window_bounds = array<i64: 1, 32>}, {pipeline_mode = #tpu.pipeline_mode<synchronous>, transform_indices = @transform_9, window_bounds = array<i64: 32, 128>}, {pipeline_mode = #tpu.pipeline_mode<synchronous>, transform_indices = @transform_10, window_bounds = array<i64: 1, 128>}, {transform_indices = @transform_11, window_bounds = array<i64: 2, 128>}]} {
    %c0 = arith.constant 0 : index
    %c0_0 = arith.constant 0 : index
    %c0_1 = arith.constant 0 : index
    %0 = vector.load %arg1[%c0, %c0_0, %c0_1] : memref<2x16x128xbf16, #tpu.memory_space<vmem>>, vector<2x16x128xbf16>
    %1 = vector.shape_cast %0 : vector<2x16x128xbf16> to vector<32x128xbf16>
    %c0_2 = arith.constant 0 : index
    %c0_3 = arith.constant 0 : index
    %2 = vector.load %arg2[%c0_2, %c0_3] : memref<128x64xbf16, #tpu.memory_space<vmem>>, vector<128x64xbf16>
    %cst = arith.constant dense<0.000000e+00> : vector<32x64xf32>
    %3 = tpu.matmul %1, %2, %cst {dimension_numbers = #tpu.dot_dimension_numbers<[1], [0], [0], [1], [0, 0, 1, 1], [], []>} : vector<32x128xbf16>, vector<128x64xbf16>, vector<32x64xf32> -> vector<32x64xf32>
    %c0_4 = arith.constant 0 : index
    %c0_5 = arith.constant 0 : index
    %4 = vector.load %arg3[%c0_4, %c0_5] : memref<1x64xf32, #tpu.memory_space<vmem>>, vector<1x64xf32>
    %5 = vector.broadcast %4 : vector<1x64xf32> to vector<32x64xf32>
    %6 = arith.addf %3, %5 : vector<32x64xf32>
    %cst_6 = arith.constant 0.000000e+00 : f32
    %7 = vector.broadcast %cst_6 : f32 to vector<32x64xf32>
    %8 = arith.maximumf %6, %7 : vector<32x64xf32>
    %9 = arith.truncf %8 : vector<32x64xf32> to vector<32x64xbf16>
    %c0_7 = arith.constant 0 : index
    %c0_8 = arith.constant 0 : index
    %10 = vector.load %arg4[%c0_7, %c0_8] : memref<64x64xbf16, #tpu.memory_space<vmem>>, vector<64x64xbf16>
    %cst_9 = arith.constant dense<0.000000e+00> : vector<32x64xf32>
    %11 = tpu.matmul %9, %10, %cst_9 {dimension_numbers = #tpu.dot_dimension_numbers<[1], [0], [0], [1], [0, 0, 1, 1], [], []>} : vector<32x64xbf16>, vector<64x64xbf16>, vector<32x64xf32> -> vector<32x64xf32>
    %c0_10 = arith.constant 0 : index
    %c0_11 = arith.constant 0 : index
    %12 = vector.load %arg5[%c0_10, %c0_11] : memref<1x64xf32, #tpu.memory_space<vmem>>, vector<1x64xf32>
    %13 = vector.broadcast %12 : vector<1x64xf32> to vector<32x64xf32>
    %14 = arith.addf %11, %13 : vector<32x64xf32>
    %cst_12 = arith.constant 0.000000e+00 : f32
    %15 = vector.broadcast %cst_12 : f32 to vector<32x64xf32>
    %16 = arith.maximumf %14, %15 : vector<32x64xf32>
    %17 = arith.truncf %16 : vector<32x64xf32> to vector<32x64xbf16>
    %c0_13 = arith.constant 0 : index
    %c0_14 = arith.constant 0 : index
    %18 = vector.load %arg6[%c0_13, %c0_14] : memref<64x32xbf16, #tpu.memory_space<vmem>>, vector<64x32xbf16>
    %cst_15 = arith.constant dense<0.000000e+00> : vector<32x32xf32>
    %19 = tpu.matmul %17, %18, %cst_15 {dimension_numbers = #tpu.dot_dimension_numbers<[1], [0], [0], [1], [0, 0, 1, 1], [], []>} : vector<32x64xbf16>, vector<64x32xbf16>, vector<32x32xf32> -> vector<32x32xf32>
    %c0_16 = arith.constant 0 : index
    %c0_17 = arith.constant 0 : index
    %20 = vector.load %arg7[%c0_16, %c0_17] : memref<1x32xf32, #tpu.memory_space<vmem>>, vector<1x32xf32>
    %21 = vector.broadcast %20 : vector<1x32xf32> to vector<32x32xf32>
    %22 = arith.addf %19, %21 : vector<32x32xf32>
    %cst_18 = arith.constant 0.000000e+00 : f32
    %23 = vector.broadcast %cst_18 : f32 to vector<32x32xf32>
    %24 = arith.maximumf %22, %23 : vector<32x32xf32>
    %25 = arith.truncf %24 : vector<32x32xf32> to vector<32x32xbf16>
    %c0_19 = arith.constant 0 : index
    %c0_20 = arith.constant 0 : index
    %26 = vector.load %arg8[%c0_19, %c0_20] : memref<32x32xbf16, #tpu.memory_space<vmem>>, vector<32x32xbf16>
    %cst_21 = arith.constant dense<0.000000e+00> : vector<32x32xf32>
    %27 = tpu.matmul %25, %26, %cst_21 {dimension_numbers = #tpu.dot_dimension_numbers<[1], [0], [0], [1], [0, 0, 1, 1], [], []>} : vector<32x32xbf16>, vector<32x32xbf16>, vector<32x32xf32> -> vector<32x32xf32>
    %c0_22 = arith.constant 0 : index
    %c0_23 = arith.constant 0 : index
    %28 = vector.load %arg9[%c0_22, %c0_23] : memref<1x32xf32, #tpu.memory_space<vmem>>, vector<1x32xf32>
    %29 = vector.broadcast %28 : vector<1x32xf32> to vector<32x32xf32>
    %30 = arith.addf %27, %29 : vector<32x32xf32>
    %31 = arith.negf %30 : vector<32x32xf32>
    %32 = math.exp %31 : vector<32x32xf32>
    %cst_24 = arith.constant 1.000000e+00 : f32
    %33 = vector.broadcast %cst_24 : f32 to vector<32x32xf32>
    %34 = arith.addf %33, %32 : vector<32x32xf32>
    %35 = arith.divf %33, %34 : vector<32x32xf32>
    %36 = arith.mulf %35, %35 : vector<32x32xf32>
    %cst_25 = arith.constant dense<0.000000e+00> : vector<32xf32>
    %37 = vector.multi_reduction <add>, %36, %cst_25 [1] : vector<32x32xf32> to vector<32xf32>
    %38 = vector.shape_cast %37 : vector<32xf32> to vector<32x1xf32>
    %39 = arith.truncf %35 : vector<32x32xf32> to vector<32x32xbf16>
    %c0_26 = arith.constant 0 : index
    %c0_27 = arith.constant 0 : index
    %40 = vector.load %arg10[%c0_26, %c0_27] : memref<32x128xbf16, #tpu.memory_space<vmem>>, vector<32x128xbf16>
    %cst_28 = arith.constant dense<0.000000e+00> : vector<32x128xf32>
    %41 = tpu.matmul %39, %40, %cst_28 {dimension_numbers = #tpu.dot_dimension_numbers<[1], [0], [0], [1], [0, 0, 1, 1], [], []>} : vector<32x32xbf16>, vector<32x128xbf16>, vector<32x128xf32> -> vector<32x128xf32>
    %42 = vector.broadcast %38 : vector<32x1xf32> to vector<32x128xf32>
    %43 = arith.addf %42, %41 : vector<32x128xf32>
    %c0_29 = arith.constant 0 : index
    %c0_30 = arith.constant 0 : index
    %44 = vector.load %arg11[%c0_29, %c0_30] : memref<1x128xf32, #tpu.memory_space<vmem>>, vector<1x128xf32>
    %45 = vector.broadcast %44 : vector<1x128xf32> to vector<32x128xf32>
    %46 = arith.addf %43, %45 : vector<32x128xf32>
    %cst_31 = arith.constant 0.000000e+00 : f32
    %47 = vector.broadcast %cst_31 : f32 to vector<32x128xf32>
    %48 = arith.maximumf %46, %47 : vector<32x128xf32>
    %49 = vector.shape_cast %48 : vector<32x128xf32> to vector<2x16x128xf32>
    %cst_32 = arith.constant dense<0x7F800000> : vector<2x128xf32>
    %50 = vector.multi_reduction <minimumf>, %49, %cst_32 [1] : vector<2x16x128xf32> to vector<2x128xf32>
    %c0_33 = arith.constant 0 : index
    %c0_34 = arith.constant 0 : index
    %51 = vector.load %arg12[%c0_33, %c0_34] : memref<2x128xf32, #tpu.memory_space<vmem>>, vector<2x128xf32>
    tpu.vector_store %arg12[%c0_33, %c0_34], %50 {strides = array<i32>} : memref<2x128xf32, #tpu.memory_space<vmem>>, vector<2x128xf32>,
    return
  }
  func.func @transform_0(%arg0: i32) -> (i32, i32, i32) {
    %c0_i32 = arith.constant 0 : i32
    %c0_i32_0 = arith.constant 0 : i32
    %c0_i32_1 = arith.constant 0 : i32
    return %arg0, %c0_i32, %c0_i32_0 : i32, i32, i32
  }
  func.func @transform_1(%arg0: i32) -> (i32, i32) {
    %c0_i32 = arith.constant 0 : i32
    %c0_i32_0 = arith.constant 0 : i32
    %c0_i32_1 = arith.constant 0 : i32
    return %c0_i32, %c0_i32_0 : i32, i32
  }
  func.func @transform_2(%arg0: i32) -> (i32, i32) {
    %c0_i32 = arith.constant 0 : i32
    %c0_i32_0 = arith.constant 0 : i32
    %c0_i32_1 = arith.constant 0 : i32
    return %c0_i32, %c0_i32_0 : i32, i32
  }
  func.func @transform_3(%arg0: i32) -> (i32, i32) {
    %c0_i32 = arith.constant 0 : i32
    %c0_i32_0 = arith.constant 0 : i32
    %c0_i32_1 = arith.constant 0 : i32
    return %c0_i32, %c0_i32_0 : i32, i32
  }
  func.func @transform_4(%arg0: i32) -> (i32, i32) {
    %c0_i32 = arith.constant 0 : i32
    %c0_i32_0 = arith.constant 0 : i32
    %c0_i32_1 = arith.constant 0 : i32
    return %c0_i32, %c0_i32_0 : i32, i32
  }
  func.func @transform_5(%arg0: i32) -> (i32, i32) {
    %c0_i32 = arith.constant 0 : i32
    %c0_i32_0 = arith.constant 0 : i32
    %c0_i32_1 = arith.constant 0 : i32
    return %c0_i32, %c0_i32_0 : i32, i32
  }
  func.func @transform_6(%arg0: i32) -> (i32, i32) {
    %c0_i32 = arith.constant 0 : i32
    %c0_i32_0 = arith.constant 0 : i32
    %c0_i32_1 = arith.constant 0 : i32
    return %c0_i32, %c0_i32_0 : i32, i32
  }
  func.func @transform_7(%arg0: i32) -> (i32, i32) {
    %c0_i32 = arith.constant 0 : i32
    %c0_i32_0 = arith.constant 0 : i32
    %c0_i32_1 = arith.constant 0 : i32
    return %c0_i32, %c0_i32_0 : i32, i32
  }
  func.func @transform_8(%arg0: i32) -> (i32, i32) {
    %c0_i32 = arith.constant 0 : i32
    %c0_i32_0 = arith.constant 0 : i32
    %c0_i32_1 = arith.constant 0 : i32
    return %c0_i32, %c0_i32_0 : i32, i32
  }
  func.func @transform_9(%arg0: i32) -> (i32, i32) {
    %c0_i32 = arith.constant 0 : i32
    %c0_i32_0 = arith.constant 0 : i32
    %c0_i32_1 = arith.constant 0 : i32
    return %c0_i32, %c0_i32_0 : i32, i32
  }
  func.func @transform_10(%arg0: i32) -> (i32, i32) {
    %c0_i32 = arith.constant 0 : i32
    %c0_i32_0 = arith.constant 0 : i32
    %c0_i32_1 = arith.constant 0 : i32
    return %c0_i32, %c0_i32_0 : i32, i32
  }
  func.func @transform_11(%arg0: i32) -> (i32, i32) {
    %c0_i32 = arith.constant 0 : i32
    %c0_i32_0 = arith.constant 0 : i32
    return %arg0, %c0_i32 : i32, i32
  }
}

</mosaic_0001>

<llo_original>
// kernel: ppnet_forward.1
$region0: #{ppnet_forward.1}
  #allocation0 [shape = 'u32[]', space=smem, size = 0x4, offset = 0x4, fixed_abs, tag = 'smem constant byte address 0x4 - core index']
  #allocation1 [shape = 'u32[144,128]{1,0:T(1,128)}', space=vmem, size = 0x12000, scoped, tag = 'internal scratch']
  %s0 = inlined_call_operand.vmem [shape: bf16[2,16,128], index: 0, kind: input, shape index: {}]
  %s1 = inlined_call_operand.vmem [shape: bf16[128,64], index: 1, kind: input, shape index: {}]
  %s2 = inlined_call_operand.vmem [shape: f32[1,64], index: 2, kind: input, shape index: {}]
  %s3 = inlined_call_operand.vmem [shape: bf16[64,64], index: 3, kind: input, shape index: {}]
  %s4 = inlined_call_operand.vmem [shape: f32[1,64], index: 4, kind: input, shape index: {}]
  %s5 = inlined_call_operand.vmem [shape: bf16[64,32], index: 5, kind: input, shape index: {}]
  %s6 = inlined_call_operand.vmem [shape: f32[1,32], index: 6, kind: input, shape index: {}]
  %s7 = inlined_call_operand.vmem [shape: bf16[32,32], index: 7, kind: input, shape index: {}]
  %s8 = inlined_call_operand.vmem [shape: f32[1,32], index: 8, kind: input, shape index: {}]
  %s9 = inlined_call_operand.vmem [shape: bf16[32,128], index: 9, kind: input, shape index: {}]
  %s10 = inlined_call_operand.vmem [shape: f32[1,128], index: 10, kind: input, shape index: {}]
  %s11 = inlined_call_operand.vmem [shape: f32[2,128], index: 11, kind: output, shape index: {}]
  %s12 = sld [smem:[#allocation0]]
  $region54: #{ppnet_forward.1} parent=0
    _
  %s14 = ssub.s32 1, %s12
  %s15 = scalar_select 0, %s14, %s12
  // Predicated region
  $region2: #{ppnet_forward.1} parent=0 // pred_check
    _
  $region3: #{ppnet_forward.1} parent=0 // pred_check_branch
    %17 = sbr.rel (0) target = $region5
  $region4: #{ppnet_forward.1} parent=0 // pred_region
    _
  $region5: #{ppnet_forward.1} parent=0 // pred_fallthru
    _
  // Predicated region
  $region6: #{ppnet_forward.1} parent=0 // pred_check
    _
  $region7: #{ppnet_forward.1} parent=0 // pred_check_branch
    %19 = sbr.rel (0) target = $region9
  $region8: #{ppnet_forward.1} parent=0 // pred_region
    _
  $region9: #{ppnet_forward.1} parent=0 // pred_fallthru
    _
  // Predicated region
  $region10: #{ppnet_forward.1} parent=0 // pred_check
    _
  $region11: #{ppnet_forward.1} parent=0 // pred_check_branch
    %21 = sbr.rel (0) target = $region13
  $region12: #{ppnet_forward.1} parent=0 // pred_region
    _
  $region13: #{ppnet_forward.1} parent=0 // pred_fallthru
    _
  // Predicated region
  $region14: #{ppnet_forward.1} parent=0 // pred_check
    _
  $region15: #{ppnet_forward.1} parent=0 // pred_check_branch
    %23 = sbr.rel (0) target = $region17
  $region16: #{ppnet_forward.1} parent=0 // pred_region
    _
  $region17: #{ppnet_forward.1} parent=0 // pred_fallthru
    _
  // Predicated region
  $region18: #{ppnet_forward.1} parent=0 // pred_check
    _
  $region19: #{ppnet_forward.1} parent=0 // pred_check_branch
    %25 = sbr.rel (0) target = $region21
  $region20: #{ppnet_forward.1} parent=0 // pred_region
    _
  $region21: #{ppnet_forward.1} parent=0 // pred_fallthru
    _
  // Predicated region
  $region22: #{ppnet_forward.1} parent=0 // pred_check
    _
  $region23: #{ppnet_forward.1} parent=0 // pred_check_branch
    %27 = sbr.rel (0) target = $region25
  $region24: #{ppnet_forward.1} parent=0 // pred_region
    _
  $region25: #{ppnet_forward.1} parent=0 // pred_fallthru
    _
  // Predicated region
  $region26: #{ppnet_forward.1} parent=0 // pred_check
    _
  $region27: #{ppnet_forward.1} parent=0 // pred_check_branch
    %29 = sbr.rel (0) target = $region29
  $region28: #{ppnet_forward.1} parent=0 // pred_region
    _
  $region29: #{ppnet_forward.1} parent=0 // pred_fallthru
    _
  // Predicated region
  $region30: #{ppnet_forward.1} parent=0 // pred_check
    _
  $region31: #{ppnet_forward.1} parent=0 // pred_check_branch
    %31 = sbr.rel (0) target = $region33
  $region32: #{ppnet_forward.1} parent=0 // pred_region
    _
  $region33: #{ppnet_forward.1} parent=0 // pred_fallthru
    _
  // Predicated region
  $region34: #{ppnet_forward.1} parent=0 // pred_check
    _
  $region35: #{ppnet_forward.1} parent=0 // pred_check_branch
    %33 = sbr.rel (0) target = $region37
  $region36: #{ppnet_forward.1} parent=0 // pred_region
    _
  $region37: #{ppnet_forward.1} parent=0 // pred_fallthru
    _
  // Predicated region
  $region38: #{ppnet_forward.1} parent=0 // pred_check
    _
  $region39: #{ppnet_forward.1} parent=0 // pred_check_branch
    %35 = sbr.rel (0) target = $region41
  $region40: #{ppnet_forward.1} parent=0 // pred_region
    _
  $region41: #{ppnet_forward.1} parent=0 // pred_fallthru
    _
  // Predicated region
  $region42: #{ppnet_forward.1} parent=0 // pred_check
    _
  $region43: #{ppnet_forward.1} parent=0 // pred_check_branch
    %37 = sbr.rel (0) target = $region45
  $region44: #{ppnet_forward.1} parent=0 // pred_region
    _
  $region45: #{ppnet_forward.1} parent=0 // pred_fallthru
    _
  %v39 = vld [vmem:[%s0] sm:$0xf]
  %v40 = vld [vmem:[%s0 + $0x4] sm:$0xf]
  %v41 = vld [vmem:[%s0 + $0x8] sm:$0xf]
  %v42 = vld [vmem:[%s0 + $0xc] sm:$0xf]
  %v43 = vld [vmem:[%s1] sm:$0xf]
  %v44 = vld [vmem:[%s1 + $0x4] sm:$0xf]
  %v45 = vld [vmem:[%s1 + $0x8] sm:$0xf]
  %v46 = vld [vmem:[%s1 + $0xc] sm:$0xf]
  %v47 = vld [vmem:[%s1 + $0x10] sm:$0xf]
  %v48 = vld [vmem:[%s1 + $0x14] sm:$0xf]
  %v49 = vld [vmem:[%s1 + $0x18] sm:$0xf]
  %v50 = vld [vmem:[%s1 + $0x1c] sm:$0xf]
  %v51 = vld [vmem:[%s1 + $0x20] sm:$0xf]
  %v52 = vld [vmem:[%s1 + $0x24] sm:$0xf]
  %v53 = vld [vmem:[%s1 + $0x28] sm:$0xf]
  %v54 = vld [vmem:[%s1 + $0x2c] sm:$0xf]
  %v55 = vld [vmem:[%s1 + $0x30] sm:$0xf]
  %v56 = vld [vmem:[%s1 + $0x34] sm:$0xf]
  %v57 = vld [vmem:[%s1 + $0x38] sm:$0xf]
  %v58 = vld [vmem:[%s1 + $0x3c] sm:$0xf]
  %v59 = vld [vmem:[%s2] sm:$0x1]
  %v61 = vlaneseq
  %v62 = vshrl.u32 %v61, 7
  %v63 = vsub.s32 0, %v62
  %v64 = vrot.slane %v59, %v63
  %v70 = vunpack.c.l.b16 %v39
  %v71 = vunpack.c.l.b16 %v40
  %v72 = vunpack.c.l.b16 %v41
  %v73 = vunpack.c.l.b16 %v42
  %v74 = vpack.c.b16 %v71, %v70
  %v75 = vpack.c.b16 %v73, %v72
  %v94 = vunpack.c.l.b16 %v43
  %v95 = vunpack.c.l.b16 %v44
  %v96 = vunpack.c.l.b16 %v45
  %v97 = vunpack.c.l.b16 %v46
  %v98 = vunpack.c.l.b16 %v47
  %v99 = vunpack.c.l.b16 %v48
  %v100 = vunpack.c.l.b16 %v49
  %v101 = vunpack.c.l.b16 %v50
  %v102 = vunpack.c.l.b16 %v51
  %v103 = vunpack.c.l.b16 %v52
  %v104 = vunpack.c.l.b16 %v53
  %v105 = vunpack.c.l.b16 %v54
  %v106 = vunpack.c.l.b16 %v55
  %v107 = vunpack.c.l.b16 %v56
  %v108 = vunpack.c.l.b16 %v57
  %v109 = vunpack.c.l.b16 %v58
  %v110 = vpack.c.b16 %v95, %v94
  %v111 = vpack.c.b16 %v97, %v96
  %v112 = vpack.c.b16 %v99, %v98
  %v113 = vpack.c.b16 %v101, %v100
  %v114 = vpack.c.b16 %v103, %v102
  %v115 = vpack.c.b16 %v105, %v104
  %v116 = vpack.c.b16 %v107, %v106
  %v117 = vpack.c.b16 %v109, %v108
  %126 = vmatprep.subr.bf16.mxu0 0
  %127 = vmatpush1.bf16.msra.mxu0 %v110
  %128 = vmatprep.subr.bf16.mxu0 0
  %129 = vmatpush1.bf16.msra.mxu0 %v111
  %130 = vmatprep.subr.bf16.mxu0 0
  %131 = vmatpush1.bf16.msra.mxu0 %v112
  %132 = vmatprep.subr.bf16.mxu0 0
  %133 = vmatpush1.bf16.msra.mxu0 %v113
  %134 = vmatprep.subr.bf16.mxu0 0
  %135 = vmatpush1.bf16.msra.mxu0 %v114
  %136 = vmatprep.subr.bf16.mxu0 0
  %137 = vmatpush1.bf16.msra.mxu0 %v115
  %138 = vmatprep.subr.bf16.mxu0 0
  %139 = vmatpush1.bf16.msra.mxu0 %v116
  %140 = vmatprep.subr.bf16.mxu0 0
  %141 = vmatpush1.bf16.msra.mxu0 %v117
  %142 = vmatprep.subr.bf16.mxu0 0
  %143 = vmatpush1.bf16.msra.mxu0 0
  %144 = vmatprep.subr.bf16.mxu0 0
  %145 = vmatpush1.bf16.msra.mxu0 0
  %146 = vmatprep.subr.bf16.mxu0 0
  %147 = vmatpush1.bf16.msra.mxu0 0
  %148 = vmatprep.subr.bf16.mxu0 0
  %149 = vmatpush1.bf16.msra.mxu0 0
  %150 = vmatprep.subr.bf16.mxu0 0
  %151 = vmatpush1.bf16.msra.mxu0 0
  %152 = vmatprep.subr.bf16.mxu0 0
  %153 = vmatpush1.bf16.msra.mxu0 0
  %154 = vmatprep.subr.bf16.mxu0 0
  %155 = vmatpush1.bf16.msra.mxu0 0
  %156 = vmatprep.subr.bf16.mxu0 0
  %157 = vmatpush1.bf16.msra.mxu0 0
  %158 = vmatprep.mubr.bf16.mxu0 0
  %159 = vmatmul.mubr.bf16.gmra.mrb[0].mxu0 %v74
  %v160 = vpop.f32.mrb[0].mxu0
  %v161 = vadd.f32 %v64, %v160
  %v162 = vpop.f32.mrb[0].mxu0
  %v163 = vpop.f32.mrb[0].mxu0
  %v164 = vadd.f32 %v64, %v163
  %v165 = vpop.f32.mrb[0].mxu0
  %166 = vmatprep.mubr.bf16.mxu0 0
  %167 = vmatmul.mubr.bf16.gmra.mrb[0].mxu0 %v75
  %v168 = vpop.f32.mrb[0].mxu0
  %v169 = vadd.f32 %v64, %v168
  %v170 = vpop.f32.mrb[0].mxu0
  %v171 = vpop.f32.mrb[0].mxu0
  %v172 = vadd.f32 %v64, %v171
  %v173 = vpop.f32.mrb[0].mxu0
  %174 = vdwg.mxu0
  %v175 = vmax.f32 %v161, 0.0
  %v176 = vmax.f32 %v164, 0.0
  %v177 = vmax.f32 %v169, 0.0
  %v178 = vmax.f32 %v172, 0.0
  %v179 = vpack.c.bf16 %v176, %v175
  %v180 = vpack.c.bf16 %v178, %v177
  %v181 = vld [vmem:[%s3] sm:$0xf]
  %v182 = vld [vmem:[%s3 + $0x4] sm:$0xf]
  %v183 = vld [vmem:[%s3 + $0x8] sm:$0xf]
  %v184 = vld [vmem:[%s3 + $0xc] sm:$0xf]
  %v185 = vld [vmem:[%s3 + $0x10] sm:$0xf]
  %v186 = vld [vmem:[%s3 + $0x14] sm:$0xf]
  %v187 = vld [vmem:[%s3 + $0x18] sm:$0xf]
  %v188 = vld [vmem:[%s3 + $0x1c] sm:$0xf]
  %v189 = vld [vmem:[%s4] sm:$0x1]
  %v191 = vlaneseq
  %v192 = vshrl.u32 %v191, 7
  %v193 = vsub.s32 0, %v192
  %v194 = vrot.slane %v189, %v193
  %v204 = vunpack.c.l.b16 %v181
  %v205 = vunpack.c.l.b16 %v182
  %v206 = vunpack.c.l.b16 %v183
  %v207 = vunpack.c.l.b16 %v184
  %v208 = vunpack.c.l.b16 %v185
  %v209 = vunpack.c.l.b16 %v186
  %v210 = vunpack.c.l.b16 %v187
  %v211 = vunpack.c.l.b16 %v188
  %v212 = vpack.c.b16 %v205, %v204
  %v213 = vpack.c.b16 %v207, %v206
  %v214 = vpack.c.b16 %v209, %v208
  %v215 = vpack.c.b16 %v211, %v210
  %vm220 = vcmask 523264
  %v222 = vsel %vm220, %v179, 0
  %v225 = vsel %vm220, %v180, 0
  %227 = vmatprep.subr.bf16.mxu0 0
  %228 = vmatpush1.bf16.msra.mxu0 %v212
  %229 = vmatprep.subr.bf16.mxu0 0
  %230 = vmatpush1.bf16.msra.mxu0 %v213
  %231 = vmatprep.subr.bf16.mxu0 0
  %232 = vmatpush1.bf16.msra.mxu0 %v214
  %233 = vmatprep.subr.bf16.mxu0 0
  %234 = vmatpush1.bf16.msra.mxu0 %v215
  %235 = vmatprep.subr.bf16.mxu0 0
  %236 = vmatpush1.bf16.msra.mxu0 0
  %237 = vmatprep.subr.bf16.mxu0 0
  %238 = vmatpush1.bf16.msra.mxu0 0
  %239 = vmatprep.subr.bf16.mxu0 0
  %240 = vmatpush1.bf16.msra.mxu0 0
  %241 = vmatprep.subr.bf16.mxu0 0
  %242 = vmatpush1.bf16.msra.mxu0 0
  %243 = vmatprep.subr.bf16.mxu0 0
  %244 = vmatpush1.bf16.msra.mxu0 0
  %245 = vmatprep.subr.bf16.mxu0 0
  %246 = vmatpush1.bf16.msra.mxu0 0
  %247 = vmatprep.subr.bf16.mxu0 0
  %248 = vmatpush1.bf16.msra.mxu0 0
  %249 = vmatprep.subr.bf16.mxu0 0
  %250 = vmatpush1.bf16.msra.mxu0 0
  %251 = vmatprep.subr.bf16.mxu0 0
  %252 = vmatpush1.bf16.msra.mxu0 0
  %253 = vmatprep.subr.bf16.mxu0 0
  %254 = vmatpush1.bf16.msra.mxu0 0
  %255 = vmatprep.subr.bf16.mxu0 0
  %256 = vmatpush1.bf16.msra.mxu0 0
  %257 = vmatprep.subr.bf16.mxu0 0
  %258 = vmatpush1.bf16.msra.mxu0 0
  %259 = vmatprep.mubr.bf16.mxu0 0
  %260 = vmatmul.mubr.bf16.gmra.mrb[0].mxu0 %v222
  %v261 = vpop.f32.mrb[0].mxu0
  %v262 = vadd.f32 %v194, %v261
  %v263 = vpop.f32.mrb[0].mxu0
  %v264 = vpop.f32.mrb[0].mxu0
  %v265 = vadd.f32 %v194, %v264
  %v266 = vpop.f32.mrb[0].mxu0
  %267 = vmatprep.mubr.bf16.mxu0 0
  %268 = vmatmul.mubr.bf16.gmra.mrb[0].mxu0 %v225
  %v269 = vpop.f32.mrb[0].mxu0
  %v270 = vadd.f32 %v194, %v269
  %v271 = vpop.f32.mrb[0].mxu0
  %v272 = vpop.f32.mrb[0].mxu0
  %v273 = vadd.f32 %v194, %v272
  %v274 = vpop.f32.mrb[0].mxu0
  %275 = vdwg.mxu0
  %v276 = vmax.f32 %v262, 0.0
  %v277 = vmax.f32 %v265, 0.0
  %v278 = vmax.f32 %v270, 0.0
  %v279 = vmax.f32 %v273, 0.0
  %v280 = vpack.c.bf16 %v277, %v276
  %v281 = vpack.c.bf16 %v279, %v278
  %v282 = vld [vmem:[%s5] sm:$0xf]
  %v283 = vld [vmem:[%s5 + $0x4] sm:$0xf]
  %v284 = vld [vmem:[%s5 + $0x8] sm:$0xf]
  %v285 = vld [vmem:[%s5 + $0xc] sm:$0xf]
  %v286 = vld [vmem:[%s5 + $0x10] sm:$0xf]
  %v287 = vld [vmem:[%s5 + $0x14] sm:$0xf]
  %v288 = vld [vmem:[%s5 + $0x18] sm:$0xf]
  %v289 = vld [vmem:[%s5 + $0x1c] sm:$0xf]
  %v290 = vld [vmem:[%s6] sm:$0x1]
  %v292 = vlaneseq
  %v293 = vshrl.u32 %v292, 7
  %v294 = vsub.s32 0, %v293
  %v295 = vrot.slane %v290, %v294
  %v305 = vunpack.c.l.b16 %v282
  %v306 = vunpack.c.l.b16 %v283
  %v307 = vunpack.c.l.b16 %v284
  %v308 = vunpack.c.l.b16 %v285
  %v309 = vunpack.c.l.b16 %v286
  %v310 = vunpack.c.l.b16 %v287
  %v311 = vunpack.c.l.b16 %v288
  %v312 = vunpack.c.l.b16 %v289
  %v313 = vpack.c.b16 %v306, %v305
  %v314 = vpack.c.b16 %v308, %v307
  %v315 = vpack.c.b16 %v310, %v309
  %v316 = vpack.c.b16 %v312, %v311
  %v322 = vsel %vm220, %v280, 0
  %v325 = vsel %vm220, %v281, 0
  %327 = vmatprep.subr.bf16.mxu0 0
  %328 = vmatpush1.bf16.msra.mxu0 %v313
  %329 = vmatprep.subr.bf16.mxu0 0
  %330 = vmatpush1.bf16.msra.mxu0 %v314
  %331 = vmatprep.subr.bf16.mxu0 0
  %332 = vmatpush1.bf16.msra.mxu0 %v315
  %333 = vmatprep.subr.bf16.mxu0 0
  %334 = vmatpush1.bf16.msra.mxu0 %v316
  %335 = vmatprep.subr.bf16.mxu0 0
  %336 = vmatpush1.bf16.msra.mxu0 0
  %337 = vmatprep.subr.bf16.mxu0 0
  %338 = vmatpush1.bf16.msra.mxu0 0
  %339 = vmatprep.subr.bf16.mxu0 0
  %340 = vmatpush1.bf16.msra.mxu0 0
  %341 = vmatprep.subr.bf16.mxu0 0
  %342 = vmatpush1.bf16.msra.mxu0 0
  %343 = vmatprep.subr.bf16.mxu0 0
  %344 = vmatpush1.bf16.msra.mxu0 0
  %345 = vmatprep.subr.bf16.mxu0 0
  %346 = vmatpush1.bf16.msra.mxu0 0
  %347 = vmatprep.subr.bf16.mxu0 0
  %348 = vmatpush1.bf16.msra.mxu0 0
  %349 = vmatprep.subr.bf16.mxu0 0
  %350 = vmatpush1.bf16.msra.mxu0 0
  %351 = vmatprep.subr.bf16.mxu0 0
  %352 = vmatpush1.bf16.msra.mxu0 0
  %353 = vmatprep.subr.bf16.mxu0 0
  %354 = vmatpush1.bf16.msra.mxu0 0
  %355 = vmatprep.subr.bf16.mxu0 0
  %356 = vmatpush1.bf16.msra.mxu0 0
  %357 = vmatprep.subr.bf16.mxu0 0
  %358 = vmatpush1.bf16.msra.mxu0 0
  %359 = vmatprep.mubr.bf16.mxu0 0
  %360 = vmatmul.mubr.bf16.gmra.mrb[0].mxu0 %v322
  %v361 = vpop.f32.mrb[0].mxu0
  %v362 = vadd.f32 %v295, %v361
  %v363 = vpop.f32.mrb[0].mxu0
  %v364 = vpop.f32.mrb[0].mxu0
  %v365 = vadd.f32 %v295, %v364
  %v366 = vpop.f32.mrb[0].mxu0
  %367 = vmatprep.mubr.bf16.mxu0 0
  %368 = vmatmul.mubr.bf16.gmra.mrb[0].mxu0 %v325
  %v369 = vpop.f32.mrb[0].mxu0
  %v370 = vadd.f32 %v295, %v369
  %v371 = vpop.f32.mrb[0].mxu0
  %v372 = vpop.f32.mrb[0].mxu0
  %v373 = vadd.f32 %v295, %v372
  %v374 = vpop.f32.mrb[0].mxu0
  %375 = vdwg.mxu0
  %v376 = vmax.f32 %v362, 0.0
  %v377 = vmax.f32 %v365, 0.0
  %v378 = vmax.f32 %v370, 0.0
  %v379 = vmax.f32 %v373, 0.0
  %v380 = vpack.c.bf16 %v377, %v376
  %v381 = vpack.c.bf16 %v379, %v378
  %v382 = vld [vmem:[%s7] sm:$0xf]
  %v383 = vld [vmem:[%s7 + $0x4] sm:$0xf]
  %v384 = vld [vmem:[%s7 + $0x8] sm:$0xf]
  %v385 = vld [vmem:[%s7 + $0xc] sm:$0xf]
  %v386 = vld [vmem:[%s8] sm:$0x1]
  %v388 = vlaneseq
  %v389 = vshrl.u32 %v388, 7
  %v390 = vsub.s32 0, %v389
  %v391 = vrot.slane %v386, %v390
  %v397 = vunpack.c.l.b16 %v382
  %v398 = vunpack.c.l.b16 %v383
  %v399 = vunpack.c.l.b16 %v384
  %v400 = vunpack.c.l.b16 %v385
  %v401 = vpack.c.b16 %v398, %v397
  %v402 = vpack.c.b16 %v400, %v399
  %vm405 = vcmask 261120
  %v407 = vsel %vm405, %v380, 0
  %v410 = vsel %vm405, %v381, 0
  %412 = vmatprep.subr.bf16.mxu0 0
  %413 = vmatpush1.bf16.msra.mxu0 %v401
  %414 = vmatprep.subr.bf16.mxu0 0
  %415 = vmatpush1.bf16.msra.mxu0 %v402
  %416 = vmatprep.subr.bf16.mxu0 0
  %417 = vmatpush1.bf16.msra.mxu0 0
  %418 = vmatprep.subr.bf16.mxu0 0
  %419 = vmatpush1.bf16.msra.mxu0 0
  %420 = vmatprep.subr.bf16.mxu0 0
  %421 = vmatpush1.bf16.msra.mxu0 0
  %422 = vmatprep.subr.bf16.mxu0 0
  %423 = vmatpush1.bf16.msra.mxu0 0
  %424 = vmatprep.subr.bf16.mxu0 0
  %425 = vmatpush1.bf16.msra.mxu0 0
  %426 = vmatprep.subr.bf16.mxu0 0
  %427 = vmatpush1.bf16.msra.mxu0 0
  %428 = vmatprep.subr.bf16.mxu0 0
  %429 = vmatpush1.bf16.msra.mxu0 0
  %430 = vmatprep.subr.bf16.mxu0 0
  %431 = vmatpush1.bf16.msra.mxu0 0
  %432 = vmatprep.subr.bf16.mxu0 0
  %433 = vmatpush1.bf16.msra.mxu0 0
  %434 = vmatprep.subr.bf16.mxu0 0
  %435 = vmatpush1.bf16.msra.mxu0 0
  %436 = vmatprep.subr.bf16.mxu0 0
  %437 = vmatpush1.bf16.msra.mxu0 0
  %438 = vmatprep.subr.bf16.mxu0 0
  %439 = vmatpush1.bf16.msra.mxu0 0
  %440 = vmatprep.subr.bf16.mxu0 0
  %441 = vmatpush1.bf16.msra.mxu0 0
  %442 = vmatprep.subr.bf16.mxu0 0
  %443 = vmatpush1.bf16.msra.mxu0 0
  %444 = vmatprep.mubr.bf16.mxu0 0
  %445 = vmatmul.mubr.bf16.gmra.mrb[0].mxu0 %v407
  %v446 = vpop.f32.mrb[0].mxu0
  %v447 = vadd.f32 %v391, %v446
  %v448 = vpop.f32.mrb[0].mxu0
  %v449 = vpop.f32.mrb[0].mxu0
  %v450 = vadd.f32 %v391, %v449
  %v451 = vpop.f32.mrb[0].mxu0
  %452 = vmatprep.mubr.bf16.mxu0 0
  %453 = vmatmul.mubr.bf16.gmra.mrb[0].mxu0 %v410
  %v454 = vpop.f32.mrb[0].mxu0
  %v455 = vadd.f32 %v391, %v454
  %v456 = vpop.f32.mrb[0].mxu0
  %v457 = vpop.f32.mrb[0].mxu0
  %v458 = vadd.f32 %v391, %v457
  %v459 = vpop.f32.mrb[0].mxu0
  %460 = vdwg.mxu0
  %v461 = vxor.u32 %v447, 2147483648
  %v462 = vxor.u32 %v450, 2147483648
  %v463 = vxor.u32 %v455, 2147483648
  %v464 = vxor.u32 %v458, 2147483648
  %v465 = vmul.f32 %v461, 1.442695
  %v466 = vpow.pop %v465
  %v467 = vmul.f32 %v462, 1.442695
  %v468 = vpow.pop %v467
  %v469 = vmul.f32 %v463, 1.442695
  %v470 = vpow.pop %v469
  %v471 = vmul.f32 %v464, 1.442695
  %v472 = vpow.pop %v471
  %v473 = vadd.f32 %v466, 1.0
  %v474 = vadd.f32 %v468, 1.0
  %v475 = vadd.f32 %v470, 1.0
  %v476 = vadd.f32 %v472, 1.0
  %v477 = vrcp.pop %v473
  %v478 = vmul.f32 1.0, %v477
  %v479 = vrcp.pop %v474
  %v480 = vmul.f32 1.0, %v479
  %v481 = vrcp.pop %v475
  %v482 = vmul.f32 1.0, %v481
  %v483 = vrcp.pop %v476
  %v484 = vmul.f32 1.0, %v483
  %v485 = vmul.f32 %v478, %v478
  %v486 = vmul.f32 %v480, %v480
  %v487 = vmul.f32 %v482, %v482
  %v488 = vmul.f32 %v484, %v484
  %v489 = vsel %vm405, %v485, 0.0
  %490 = vadd.xlane.f32.xlu0 %v489
  %v491 = vpop.xlane.xlu0 %490
  %v492 = vsel %vm405, %v486, 0.0
  %493 = vadd.xlane.f32.xlu0 %v492
  %v494 = vpop.xlane.xlu0 %493
  %v495 = vsel %vm405, %v487, 0.0
  %496 = vadd.xlane.f32.xlu0 %v495
  %v497 = vpop.xlane.xlu0 %496
  %v498 = vsel %vm405, %v488, 0.0
  %499 = vadd.xlane.f32.xlu0 %v498
  %v500 = vpop.xlane.xlu0 %499
  %v501 = vpack.c.bf16 %v480, %v478
  %v502 = vpack.c.bf16 %v484, %v482
  %v503 = vld [vmem:[%s9] sm:$0xf]
  %v504 = vld [vmem:[%s9 + $0x4] sm:$0xf]
  %v505 = vld [vmem:[%s9 + $0x8] sm:$0xf]
  %v506 = vld [vmem:[%s9 + $0xc] sm:$0xf]
  %v511 = vunpack.c.l.b16 %v503
  %v512 = vunpack.c.l.b16 %v504
  %v513 = vunpack.c.l.b16 %v505
  %v514 = vunpack.c.l.b16 %v506
  %v515 = vpack.c.b16 %v512, %v511
  %v516 = vpack.c.b16 %v514, %v513
  %v520 = vsel %vm405, %v501, 0
  %v523 = vsel %vm405, %v502, 0
  %525 = vmatprep.subr.bf16.mxu0 0
  %526 = vmatpush1.bf16.msra.mxu0 %v515
  %527 = vmatprep.subr.bf16.mxu0 0
  %528 = vmatpush1.bf16.msra.mxu0 %v516
  %529 = vmatprep.subr.bf16.mxu0 0
  %530 = vmatpush1.bf16.msra.mxu0 0
  %531 = vmatprep.subr.bf16.mxu0 0
  %532 = vmatpush1.bf16.msra.mxu0 0
  %533 = vmatprep.subr.bf16.mxu0 0
  %534 = vmatpush1.bf16.msra.mxu0 0
  %535 = vmatprep.subr.bf16.mxu0 0
  %536 = vmatpush1.bf16.msra.mxu0 0
  %537 = vmatprep.subr.bf16.mxu0 0
  %538 = vmatpush1.bf16.msra.mxu0 0
  %539 = vmatprep.subr.bf16.mxu0 0
  %540 = vmatpush1.bf16.msra.mxu0 0
  %541 = vmatprep.subr.bf16.mxu0 0
  %542 = vmatpush1.bf16.msra.mxu0 0
  %543 = vmatprep.subr.bf16.mxu0 0
  %544 = vmatpush1.bf16.msra.mxu0 0
  %545 = vmatprep.subr.bf16.mxu0 0
  %546 = vmatpush1.bf16.msra.mxu0 0
  %547 = vmatprep.subr.bf16.mxu0 0
  %548 = vmatpush1.bf16.msra.mxu0 0
  %549 = vmatprep.subr.bf16.mxu0 0
  %550 = vmatpush1.bf16.msra.mxu0 0
  %551 = vmatprep.subr.bf16.mxu0 0
  %552 = vmatpush1.bf16.msra.mxu0 0
  %553 = vmatprep.subr.bf16.mxu0 0
  %554 = vmatpush1.bf16.msra.mxu0 0
  %555 = vmatprep.subr.bf16.mxu0 0
  %556 = vmatpush1.bf16.msra.mxu0 0
  %557 = vmatprep.mubr.bf16.mxu0 0
  %558 = vmatmul.mubr.bf16.gmra.mrb[0].mxu0 %v520
  %v559 = vpop.f32.mrb[0].mxu0
  %v560 = vadd.f32 0.0, %v559
  %v561 = vpop.f32.mrb[0].mxu0
  %v562 = vpop.f32.mrb[0].mxu0
  %v563 = vadd.f32 0.0, %v562
  %v564 = vpop.f32.mrb[0].mxu0
  %565 = vmatprep.mubr.bf16.mxu0 0
  %566 = vmatmul.mubr.bf16.gmra.mrb[0].mxu0 %v523
  %v567 = vpop.f32.mrb[0].mxu0
  %v568 = vadd.f32 0.0, %v567
  %v569 = vpop.f32.mrb[0].mxu0
  %v570 = vpop.f32.mrb[0].mxu0
  %v571 = vadd.f32 0.0, %v570
  %v572 = vpop.f32.mrb[0].mxu0
  %573 = vdwg.mxu0
  %v574 = vadd.f32 %v491, %v560
  %v575 = vadd.f32 %v494, %v563
  %v576 = vadd.f32 %v497, %v568
  %v577 = vadd.f32 %v500, %v571
  %v578 = vld [vmem:[%s10] sm:$0x1]
  %v580 = vlaneseq
  %v581 = vshrl.u32 %v580, 7
  %v582 = vsub.s32 0, %v581
  %v583 = vrot.slane %v578, %v582
  %v585 = vadd.f32 %v574, %v583
  %v586 = vadd.f32 %v575, %v583
  %v587 = vadd.f32 %v576, %v583
  %v588 = vadd.f32 %v577, %v583
  %v589 = vmax.f32 %v585, 0.0
  %v590 = vmax.f32 %v586, 0.0
  %v591 = vmax.f32 %v587, 0.0
  %v592 = vmax.f32 %v588, 0.0
  %v593 = vmin.f32 %v589, %v590
  %v594 = vrot.slane %v593, 4
  %v595 = vmin.f32 %v593, %v594
  %v596 = vrot.slane %v595, 2
  %v597 = vmin.f32 %v595, %v596
  %v598 = vrot.slane %v597, 1
  %v599 = vmin.f32 %v597, %v598
  %v600 = vmin.f32 %v591, %v592
  %v601 = vrot.slane %v600, 4
  %v602 = vmin.f32 %v600, %v601
  %v603 = vrot.slane %v602, 2
  %v604 = vmin.f32 %v602, %v603
  %v605 = vrot.slane %v604, 1
  %v606 = vmin.f32 %v604, %v605
  %vm609 = vcmask 1041409
  %v610 = vsel %vm609, %v606, %v599
  %612 = vst [vmem:[%s11] sm:$0x3] %v610
  // Predicated region
  $region46: #{ppnet_forward.1} parent=0 // pred_check
    _
  $region47: #{ppnet_forward.1} parent=0 // pred_check_branch
    %614 = sbr.rel (0) target = $region49
  $region48: #{ppnet_forward.1} parent=0 // pred_region
    _
  $region49: #{ppnet_forward.1} parent=0 // pred_fallthru
    _
  // Predicated region
  $region50: #{ppnet_forward.1} parent=0 // pred_check
    _
  $region51: #{ppnet_forward.1} parent=0 // pred_check_branch
    %616 = sbr.rel (0) target = $region53
  $region52: #{ppnet_forward.1} parent=0 // pred_region
    _
  $region53: #{ppnet_forward.1} parent=0 // pred_fallthru
    _

</llo_original>
